<compile_context>
chip_gen: v7x
topology: tpu7x:2x2x1
jax: 0.10.0
libtpu: 0.0.40
codegen_flags: <defaults>
</compile_context>

<pallas_src>
import warnings

import numpy as np
import jax
import jax.numpy as jnp
from jax import lax
from jax.experimental import pallas as pl
from jax.experimental.pallas import tpu as pltpu

# ---- D3 constants (as used by sPhysNet's edisp) ----
D3_AUTOANG = 0.52917726   # bohr <-> angstrom conversion
D3_K1 = 16.000
D3_K3 = -4.000
D3_MAXC = 5               # max number of coordination-number references

_C_REF = D3_MAXC * D3_MAXC   # 25 CN references per element pair
_C_PAD = 32                  # padded to a sublane multiple (padded rows: cn0 = 0)


def _round_up(x, m):
    return ((x + m - 1) // m) * m


def _num_tensorcores_hint():
    """2 independent edge slices only pay off on v7x (2 TensorCores/chip)."""
    try:
        kind = jax.devices()[0].device_kind.lower()
    except Exception:
        return 1
    return 2 if "v7" in kind else 1


# ---------------------------------------------------------------------------
# shared helper: segment-sum of a [1, TE] edge row into [1, A] atoms.
# Exact 0/1 one-hot in bf16 + hi/lo bf16 split of the values -> 2 DEFAULT MXU
# passes with f32 accumulation (~f32 accuracy, half the passes / one-hot
# traffic of a HIGHEST f32 matmul).  One-hot is built per bounded atom tile.
# ---------------------------------------------------------------------------
def _segment_sum_hi_lo(vals, ii, num_atoms, a_tile):
    te = vals.shape[1]
    hi = vals.astype(jnp.bfloat16)
    lo = (vals - hi.astype(jnp.float32)).astype(jnp.bfloat16)
    dn = (((1,), (1,)), ((), ()))
    parts = []
    # NOTE: static Python loop; n_atom_tiles is small because a_tile<=256.  For
    # very large molecules switch this to a grid axis / fori_loop to bound live
    # ranges.
    for a0 in range(0, num_atoms, a_tile):
        iota = lax.broadcasted_iota(jnp.int32, (a_tile, te), 0) + a0
        g = (iota == ii).astype(jnp.bfloat16)          # exact 0/1 one-hot
        acc = lax.dot_general(hi, g, dn, preferred_element_type=jnp.float32)
        acc = acc + lax.dot_general(lo, g, dn, preferred_element_type=jnp.float32)
        parts.append(acc)
    return parts[0] if len(parts) == 1 else jnp.concatenate(parts, axis=1)


# ---------------------------------------------------------------------------
# phase 1: coordination numbers   nc[a] = sum_{e: idx_i[e]==a} damp[e]
# packed edge rows: 0=idx_i (f32-encoded), 1=dist, 2=rcov_i+rcov_j, 3=mask
# ---------------------------------------------------------------------------
def _make_nc_kernel(a_tile):
    def kernel(pack_ref, nc_ref):
        t = pl.program_id(1)

        @pl.when(t == 0)
        def _():
            nc_ref[...] = jnp.zeros_like(nc_ref)

        num_atoms = nc_ref.shape[1]

        ii = pack_ref[0:1, :].astype(jnp.int32)            # exact (< 2^24)
        dist = pack_ref[1:2, :]
        rcovs = pack_ref[2:3, :]
        mask = pack_ref[3:4, :]

        r = dist * (1.0 / D3_AUTOANG)                      # distances in bohr
        rr = rcovs / r                                     # (rcov_i + rcov_j)/r
        damp = 1.0 / (1.0 + jnp.exp(-D3_K1 * (rr - 1.0)))
        vals = jnp.where(mask > 0.0, damp, 0.0)            # [1, TE]

        nc_ref[...] += _segment_sum_hi_lo(vals, ii, num_atoms, a_tile)

    return kernel


# ---------------------------------------------------------------------------
# phase 2: C6 interpolation + BJ damping + per-atom energy accumulation
# packed edge rows: 0=idx_i, 1=dist, 2=mask, 3=r2r4_i*r2r4_j, 4=nci, 5=ncj
# cn pack: rows 0-31 = reference C6, 32-63 = reference CN_i, 64-95 = CN_j
# ---------------------------------------------------------------------------
def _make_energy_kernel(a_tile, s6, s8, a1, a2):
    s6 = float(s6); s8 = float(s8); a1 = float(a1); a2 = float(a2)

    def kernel(pack_ref, cn_ref, out_ref):
        t = pl.program_id(1)

        @pl.when(t == 0)
        def _():
            out_ref[...] = jnp.zeros_like(out_ref)

        num_atoms = out_ref.shape[1]

        ii = pack_ref[0:1, :].astype(jnp.int32)
        dist = pack_ref[1:2, :]
        mask = pack_ref[2:3, :]
        r2r4p = pack_ref[3:4, :]                            # r2r4[Zi]*r2r4[Zj]
        nci = pack_ref[4:5, :]
        ncj = pack_ref[5:6, :]

        # static, 32-sublane-aligned slices of the packed CN tables (no copies)
        cn0 = cn_ref[0:_C_PAD, :]        # reference C6   (padded rows are 0)
        cn1 = cn_ref[_C_PAD:2 * _C_PAD, :]
        cn2 = cn_ref[2 * _C_PAD:3 * _C_PAD, :]

        # ---- C6 interpolation, vectorized over the 25 CN references ----
        rd = (cn1 - nci) ** 2 + (cn2 - ncj) ** 2            # [32, TE]
        t1 = jnp.exp(D3_K3 * rd)                            # EUP-bound
        pos = cn0 > 0.0
        rsum = jnp.sum(jnp.where(pos, t1, 0.0), axis=0, keepdims=True)
        csum = jnp.sum(jnp.where(pos, t1 * cn0, 0.0), axis=0, keepdims=True)
        # The original module's c6mem/r_save bookkeeping is dead code (c6mem is
        # compared against the already-updated r_save, so it never changes from
        # -inf); the rsum==0 fallback is therefore exactly -inf.
        c6 = jnp.where(rsum > 0.0, csum / rsum, -jnp.inf)

        c8 = 3.0 * c6 * r2r4p
        # sqrt(c8/c6) == sqrt(3*r2r4_i*r2r4_j): removes a divide and a 0/0 hazard.
        tmp = a1 * jnp.sqrt(3.0 * r2r4p) + a2

        # ---- Becke-Johnson damping ----
        r = dist * (1.0 / D3_AUTOANG)
        r2 = r * r
        r6 = r2 * r2 * r2
        r8 = r6 * r2
        tmp2 = tmp * tmp
        tmp6 = tmp2 * tmp2 * tmp2
        tmp8 = tmp6 * tmp2
        # approx reciprocal -> EUP slot (phase 2 is EUP-bound on the [32,TE] exp)
        e6 = (-0.5 * s6) * c6 * pl.reciprocal(r6 + tmp6, approx=True)
        e8 = (-0.5 * s8) * c8 * pl.reciprocal(r8 + tmp8, approx=True)
        # where (not *mask): a padded/degenerate edge carrying inf would otherwise
        # turn into NaN and be scatter-added into atom 0.
        e = jnp.where(mask > 0.0, e6 + e8, 0.0)             # [1, TE]

        out_ref[...] += _segment_sum_hi_lo(e, ii, num_atoms, a_tile)

    return kernel


# ---------------------------------------------------------------------------
# wrapper
# ---------------------------------------------------------------------------
def d3_dispersion_pallas(Z, edge_dist, edge_index, rcov, r2r4, c6ab_t,
                         *, s6, s8, a1, a2):
    """c6ab_t: pre-permuted C6 reference table, shape [3, 25, ZMAX, ZMAX]."""
    N = int(Z.shape[0])
    Eg = int(edge_dist.shape[0])

    A = _round_up(max(N, 8), 128)        # atoms live on the accumulator lanes
    A_TILE = min(A, 256)                 # bounded one-hot / MXU-width N dim

    E128 = _round_up(max(Eg, 1), 128)

    # ---- edge tile size from in-kernel VMEM pressure (not the tiny DMAs):
    #      bf16 one-hot (A_TILE sublanes) + ~6 live [32,TE] f32 temporaries
    #      + double-buffered packed inputs (8 + 96 f32 rows).
    per_lane_bytes = 2 * A_TILE + 6 * _C_PAD * 4 + 2 * (8 + 3 * _C_PAD) * 4
    TILE_E = min(2048, E128)
    while TILE_E > 128 and per_lane_bytes * TILE_E > (12 << 20):
        TILE_E //= 2

    # ---- slice ("parallel") axis: 2 only on v7x, and only if both slices get
    #      real edges; tiles are interleaved across slices to balance padding.
    num_slices = _num_tensorcores_hint()
    if num_slices > 1:
        while TILE_E > 128 and E128 < num_slices * TILE_E:
            TILE_E //= 2
        if E128 < num_slices * TILE_E:
            num_slices = 1

    E_pad = _round_up(E128, num_slices * TILE_E)
    n_tiles = E_pad // (num_slices * TILE_E)     # edge tiles per slice

    idx_i = edge_index[0, :].astype(jnp.int32)
    idx_j = edge_index[1, :].astype(jnp.int32)

    # pad edges (padded edges are masked; padded dist = 1.0 keeps the math finite)
    ii = jnp.zeros((E_pad,), jnp.int32).at[:Eg].set(idx_i)
    jj = jnp.zeros((E_pad,), jnp.int32).at[:Eg].set(idx_j)
    dist = jnp.ones((E_pad,), jnp.float32).at[:Eg].set(edge_dist.astype(jnp.float32))
    emask = jnp.zeros((E_pad,), jnp.float32).at[:Eg].set(1.0)

    # ---- element-table gathers hoisted to XLA ----
    Zc = Z.astype(jnp.int32)
    Zi = Zc[ii]
    Zj = Zc[jj]
    rcov = jnp.asarray(rcov, jnp.float32)
    r2r4 = jnp.asarray(r2r4, jnp.float32)
    rcov_sum = rcov[Zi] + rcov[Zj]                                  # [E_pad]
    r2r4_prod = r2r4[Zi] * r2r4[Zj]                                 # [E_pad]
    # gather straight into [3, 25, E_pad] (table pre-permuted at __init__),
    # pad 25 -> 32 sublanes, flatten to one sublane-dense [96, E_pad] block.
    tab = jnp.asarray(c6ab_t, jnp.float32)[:, :, Zi, Zj]            # [3,25,E_pad]
    cn_pack = jnp.zeros((3, _C_PAD, E_pad), jnp.float32)
    cn_pack = cn_pack.at[:, :_C_REF, :].set(tab).reshape(3 * _C_PAD, E_pad)

    ii_f = ii.astype(jnp.float32)                 # exact for indices < 2^24
    zrow = jnp.zeros((E_pad,), jnp.float32)

    grid = (num_slices, n_tiles)
    edge_map = lambda c, t: (0, t * num_slices + c)        # interleave slices
    pack_spec = pl.BlockSpec((8, TILE_E), edge_map)
    cn_spec = pl.BlockSpec((3 * _C_PAD, TILE_E), edge_map)
    atom_acc = pl.BlockSpec((1, A), lambda c, t: (c, 0))   # resident per-slice acc
    cparams = pltpu.CompilerParams(
        dimension_semantics=("parallel", "arbitrary"),
        vmem_limit_bytes=32 * 1024 * 1024)

    # ---- phase 1: coordination numbers ----
    pack1 = jnp.stack([ii_f, dist, rcov_sum, emask, zrow, zrow, zrow, zrow], axis=0)
    nc_parts = pl.pallas_call(
        _make_nc_kernel(A_TILE),
        out_shape=jax.ShapeDtypeStruct((num_slices, A), jnp.float32),
        grid=grid,
        in_specs=[pack_spec],
        out_specs=atom_acc,
        compiler_params=cparams,
    )(pack1)
    nc = jnp.sum(nc_parts, axis=0)                                  # [A]

    # ---- nci / ncj hoisted to an XLA gather (no g_j one-hot in the kernel) ----
    nci = nc[ii]
    ncj = nc[jj]

    # ---- phase 2: C6 interpolation + BJ damping + per-atom energy ----
    pack2 = jnp.stack([ii_f, dist, emask, r2r4_prod, nci, ncj, zrow, zrow], axis=0)
    e_parts = pl.pallas_call(
        _make_energy_kernel(A_TILE, s6, s8, a1, a2),
        out_shape=jax.ShapeDtypeStruct((num_slices, A), jnp.float32),
        grid=grid,
        in_specs=[pack_spec, cn_spec],
        out_specs=atom_acc,
        compiler_params=cparams,
    )(pack2, cn_pack)

    return jnp.sum(e_parts, axis=0)[:N]            # == E_atom_d3.view(-1)


class D3DispersionLayer:
    """JAX/Pallas port of sphysnet_taut D3DispersionLayer (forward only)."""

    def __init__(self, s6, s8, a1, a2, rcov, r2r4, c6ab):
        warnings.warn('D3 dispersion algorithm is unstable when molecule grows '
                      'larger (0./0. when calculating c6 coe.)', DeprecationWarning)
        self.s6, self.s8, self.a1, self.a2 = s6, s8, a1, a2
        self.rcov = jnp.asarray(rcov, jnp.float32)
        self.r2r4 = jnp.asarray(r2r4, jnp.float32)
        # pre-permute the C6 table once: [Z,Z,5,5,3] -> [3, 25, Z, Z] so the
        # per-call wrapper gathers directly into [3, 25, E] (no per-call transpose)
        c6ab = jnp.asarray(c6ab, jnp.float32)
        zmax = c6ab.shape[0]
        self.c6ab_t = jnp.transpose(
            c6ab.reshape(zmax, zmax, _C_REF, 3), (3, 2, 0, 1))

    def __call__(self, Z, edge_dist, edge_index):
        return d3_dispersion_pallas(Z, edge_dist, edge_index,
                                    self.rcov, self.r2r4, self.c6ab_t,
                                    s6=self.s6, s8=self.s8, a1=self.a1, a2=self.a2)


# ---- pure-JAX reference (mirrors the original torch edisp, incl. dead c6mem) ----
def d3_reference(Z, edge_dist, idx_i, idx_j, rcov, r2r4, c6ab, s6, s8, a1, a2):
    N = Z.shape[0]
    r = edge_dist / D3_AUTOANG
    Zi, Zj = Z[idx_i], Z[idx_j]
    rr = (rcov[Zi] + rcov[Zj]) / r
    damp = 1.0 / (1.0 + jnp.exp(-D3_K1 * (rr - 1.0)))
    nc = jax.ops.segment_sum(damp, idx_i, num_segments=N)
    nci, ncj = nc[idx_i], nc[idx_j]
    tab = c6ab[Zi, Zj]                                   # [E, 5, 5, 3]
    c6mem = jnp.full_like(nci, -jnp.inf)
    r_save = jnp.full_like(nci, jnp.inf)
    rsum = jnp.zeros_like(nci)
    csum = jnp.zeros_like(nci)
    for i in range(D3_MAXC):
        for j in range(D3_MAXC):
            cn0, cn1, cn2 = tab[:, i, j, 0], tab[:, i, j, 1], tab[:, i, j, 2]
            rd = (cn1 - nci) ** 2 + (cn2 - ncj) ** 2
            r_save = jnp.where(rd < r_save, rd, r_save)
            c6mem = jnp.where(rd < r_save, cn0, c6mem)   # dead, as in the source
            t1 = jnp.exp(D3_K3 * rd)
            rsum = rsum + jnp.where(cn0 > 0.0, t1, 0.0)
            csum = csum + jnp.where(cn0 > 0.0, t1 * cn0, 0.0)
    c6 = jnp.where(rsum > 0.0, csum / rsum, c6mem)
    c8 = 3.0 * c6 * r2r4[Zi] * r2r4[Zj]
    r2 = r ** 2; r6 = r2 ** 3; r8 = r6 * r2
    tmp = a1 * jnp.sqrt(c8 / c6) + a2
    tmp2 = tmp ** 2; tmp6 = tmp2 ** 3; tmp8 = tmp6 * tmp2
    e6 = -0.5 * s6 * c6 / (r6 + tmp6)
    e8 = -0.5 * s8 * c8 / (r8 + tmp8)
    return jax.ops.segment_sum(e6 + e8, idx_i, num_segments=N)


if __name__ == "__main__":
    warnings.simplefilter("ignore", DeprecationWarning)
    key = jax.random.PRNGKey(0)
    kZ, kpos, krc, kr24, kc6 = jax.random.split(key, 5)

    N = 8          # atoms
    ZMAX = 10      # synthetic element-table size (atomic numbers 1..9 used)

    Z = jax.random.randint(kZ, (N,), 1, ZMAX, dtype=jnp.int32)
    # fully connected (no self loops) edge list: E = N*(N-1) = 56
    ii, jj = jnp.meshgrid(jnp.arange(N), jnp.arange(N), indexing="ij")
    sel = ii != jj
    idx_i = ii[sel].astype(jnp.int32)
    idx_j = jj[sel].astype(jnp.int32)
    edge_index = jnp.stack([idx_i, idx_j], axis=0)

    pos = jax.random.uniform(kpos, (N, 3), minval=-3.0, maxval=3.0)
    edge_dist = jnp.linalg.norm(pos[idx_i] - pos[idx_j], axis=-1) + 0.5  # angstrom

    # deterministic synthetic D3 parameter tables
    rcov = jax.random.uniform(krc, (ZMAX,), minval=0.5, maxval=1.5)
    r2r4 = jax.random.uniform(kr24, (ZMAX,), minval=1.0, maxval=3.0)
    raw = jax.random.uniform(kc6, (ZMAX, ZMAX, D3_MAXC, D3_MAXC, 3))
    c6ab = jnp.stack([raw[..., 0] * 19.0 + 1.0,   # reference C6 (>0)
                      raw[..., 1] * 4.0,          # reference CN_i
                      raw[..., 2] * 4.0],         # reference CN_j
                     axis=-1)

    s6, s8, a1, a2 = 1.0, 0.9171, 0.3385, 2.8830
    layer = D3DispersionLayer(s6, s8, a1, a2, rcov, r2r4, c6ab)

    out = layer(Z, edge_dist, edge_index)
    out = jax.block_until_ready(out)

    ref = d3_reference(Z, edge_dist, idx_i, idx_j, rcov, r2r4, c6ab, s6, s8, a1, a2)
    assert out.shape == (N,)
    # the hi/lo bf16 scatter split is ~f32-accurate; the tolerance is sized for
    # the approx-reciprocal (EUP) e6/e8 denominators.
    np.testing.assert_allclose(np.asarray(out), np.asarray(ref), rtol=1e-2, atol=1e-7)

    print("KERNEL_OK")
</pallas_src>

<mosaic_0001>
module attributes {stable_mosaic.version = 11 : i64} {
  func.func @kernel(%arg0: i32, %arg1: i32, %arg2: memref<8x128xf32, #tpu.memory_space<vmem>>, %arg3: memref<1x128xf32, #tpu.memory_space<vmem>>) attributes {dimension_semantics = [#tpu.dimension_semantics<parallel>, #tpu.dimension_semantics<arbitrary>], iteration_bounds = array<i64: 1, 1>, scalar_prefetch = 0 : i64, scratch_operands = 0 : i64, tpu.core_type = #tpu.core_type<tc>, window_params = [{transform_indices = @transform_0, window_bounds = array<i64: 8, 128>}, {transform_indices = @transform_1, window_bounds = array<i64: 1, 128>}]} {
    %c0_i32 = arith.constant 0 : i32
    %0 = arith.cmpi eq, %arg1, %c0_i32 : i32
    %1 = arith.extui %0 : i1 to i32
    %c0_i32_0 = arith.constant 0 : i32
    %2 = arith.cmpi ne, %1, %c0_i32_0 : i32
    scf.if %2 {
      %cst_18 = arith.constant 0.000000e+00 : f32
      %42 = vector.broadcast %cst_18 : f32 to vector<1x128xf32>
      %c0_19 = arith.constant 0 : index
      %c0_20 = arith.constant 0 : index
      %43 = vector.load %arg3[%c0_19, %c0_20] : memref<1x128xf32, #tpu.memory_space<vmem>>, vector<1x128xf32>
      tpu.vector_store %arg3[%c0_19, %c0_20], %42 {strides = array<i32>} : memref<1x128xf32, #tpu.memory_space<vmem>>, vector<1x128xf32>,
    } else {
    }
    %c0 = arith.constant 0 : index
    %c0_1 = arith.constant 0 : index
    %3 = vector.load %arg2[%c0, %c0_1] : memref<8x128xf32, #tpu.memory_space<vmem>>, vector<1x128xf32>
    %4 = arith.fptosi %3 : vector<1x128xf32> to vector<1x128xi32>
    %c1 = arith.constant 1 : index
    %c0_2 = arith.constant 0 : index
    %5 = vector.load %arg2[%c1, %c0_2] : memref<8x128xf32, #tpu.memory_space<vmem>>, vector<1x128xf32>
    %c2 = arith.constant 2 : index
    %c0_3 = arith.constant 0 : index
    %6 = vector.load %arg2[%c2, %c0_3] : memref<8x128xf32, #tpu.memory_space<vmem>>, vector<1x128xf32>
    %c3 = arith.constant 3 : index
    %c0_4 = arith.constant 0 : index
    %7 = vector.load %arg2[%c3, %c0_4] : memref<8x128xf32, #tpu.memory_space<vmem>>, vector<1x128xf32>
    %cst = arith.constant 1.88972592 : f32
    %8 = vector.broadcast %cst : f32 to vector<1x128xf32>
    %9 = arith.mulf %5, %8 : vector<1x128xf32>
    %10 = arith.divf %6, %9 : vector<1x128xf32>
    %cst_5 = arith.constant 1.000000e+00 : f32
    %11 = vector.broadcast %cst_5 : f32 to vector<1x128xf32>
    %12 = arith.subf %10, %11 : vector<1x128xf32>
    %cst_6 = arith.constant -1.600000e+01 : f32
    %13 = vector.broadcast %cst_6 : f32 to vector<1x128xf32>
    %14 = arith.mulf %13, %12 : vector<1x128xf32>
    %15 = math.exp %14 : vector<1x128xf32>
    %cst_7 = arith.constant 1.000000e+00 : f32
    %16 = vector.broadcast %cst_7 : f32 to vector<1x128xf32>
    %17 = arith.addf %16, %15 : vector<1x128xf32>
    %cst_8 = arith.constant 1.000000e+00 : f32
    %18 = vector.broadcast %cst_8 : f32 to vector<1x128xf32>
    %19 = arith.divf %18, %17 : vector<1x128xf32>
    %cst_9 = arith.constant 0.000000e+00 : f32
    %20 = vector.broadcast %cst_9 : f32 to vector<1x128xf32>
    %21 = arith.cmpf ogt, %7, %20 : vector<1x128xf32>
    %cst_10 = arith.constant 0.000000e+00 : f32
    %22 = vector.broadcast %cst_10 : f32 to vector<1x128xf32>
    %23 = arith.select %21, %19, %22 : vector<1x128xi1>, vector<1x128xf32>
    %c0_11 = arith.constant 0 : index
    %c0_12 = arith.constant 0 : index
    %24 = vector.load %arg3[%c0_11, %c0_12] : memref<1x128xf32, #tpu.memory_space<vmem>>, vector<1x128xf32>
    %25 = arith.truncf %23 : vector<1x128xf32> to vector<1x128xbf16>
    %26 = arith.extf %25 : vector<1x128xbf16> to vector<1x128xf32>
    %27 = arith.subf %23, %26 : vector<1x128xf32>
    %28 = arith.truncf %27 : vector<1x128xf32> to vector<1x128xbf16>
    %29 = tpu.iota {dimensions = array<i32: 0>} : vector<128x128xi32>
    %c0_i32_13 = arith.constant 0 : i32
    %30 = vector.broadcast %c0_i32_13 : i32 to vector<128x128xi32>
    %31 = arith.addi %29, %30 : vector<128x128xi32>
    %32 = vector.broadcast %4 : vector<1x128xi32> to vector<128x128xi32>
    %33 = arith.cmpi eq, %31, %32 : vector<128x128xi32>
    %34 = arith.extui %33 : vector<128x128xi1> to vector<128x128xi32>
    %35 = arith.sitofp %34 : vector<128x128xi32> to vector<128x128xf32>
    %36 = arith.truncf %35 : vector<128x128xf32> to vector<128x128xbf16>
    %cst_14 = arith.constant dense<0.000000e+00> : vector<1x128xf32>
    %37 = tpu.matmul %25, %36, %cst_14 {dimension_numbers = #tpu.dot_dimension_numbers<[1], [1], [0], [0], [0, 0, 1, 0], [], []>} : vector<1x128xbf16>, vector<128x128xbf16>, vector<1x128xf32> -> vector<1x128xf32>
    %cst_15 = arith.constant dense<0.000000e+00> : vector<1x128xf32>
    %38 = tpu.matmul %28, %36, %cst_15 {dimension_numbers = #tpu.dot_dimension_numbers<[1], [1], [0], [0], [0, 0, 1, 0], [], []>} : vector<1x128xbf16>, vector<128x128xbf16>, vector<1x128xf32> -> vector<1x128xf32>
    %39 = arith.addf %37, %38 : vector<1x128xf32>
    %40 = arith.addf %24, %39 : vector<1x128xf32>
    %c0_16 = arith.constant 0 : index
    %c0_17 = arith.constant 0 : index
    %41 = vector.load %arg3[%c0_16, %c0_17] : memref<1x128xf32, #tpu.memory_space<vmem>>, vector<1x128xf32>
    tpu.vector_store %arg3[%c0_16, %c0_17], %40 {strides = array<i32>} : memref<1x128xf32, #tpu.memory_space<vmem>>, vector<1x128xf32>,
    return
  }
  func.func @transform_0(%arg0: i32, %arg1: i32) -> (i32, i32) {
    %c1_i32 = arith.constant 1 : i32
    %0 = arith.muli %arg1, %c1_i32 : i32
    %1 = arith.addi %0, %arg0 : i32
    %c0_i32 = arith.constant 0 : i32
    %c0_i32_0 = arith.constant 0 : i32
    return %c0_i32, %1 : i32, i32
  }
  func.func @transform_1(%arg0: i32, %arg1: i32) -> (i32, i32) {
    %c0_i32 = arith.constant 0 : i32
    %c0_i32_0 = arith.constant 0 : i32
    return %arg0, %c0_i32 : i32, i32
  }
}

</mosaic_0001>

<llo_original>
// kernel: tpu_custom_call.1
$region0: #{tpu_custom_call.1}
  #allocation0 [shape = 'u32[]', space=smem, size = 0x4, offset = 0x4, fixed_abs, tag = 'smem constant byte address 0x4 - core index']
  #allocation1 [shape = 'u32[144,128]{1,0:T(1,128)}', space=vmem, size = 0x12000, scoped, tag = 'internal scratch']
  %s0 = inlined_call_operand.hbm [shape: f32[8,128], index: 0, kind: input, shape index: {}]
  %s1 = inlined_call_operand.hbm [shape: f32[1,128], index: 1, kind: output, shape index: {}]
  %s2 = sld [smem:[#allocation0]]
  $region22: #{tpu_custom_call.1} parent=0
    _
  %s4 = ssub.s32 1, %s2
  %s5 = scalar_select 0, %s4, %s2
  $region1: #{tpu_custom_call.1} parent=0
    #allocation2 [shape = 'u8[4096]{0}', space=vmem, size = 0x1000, scoped, tag = 'input window, operand 0, single buffered']
    #allocation3 [shape = 's32[1]{0}', space=sflag, size = 0x4, scoped, tag = 'scoped memory for tpu_custom_call.1']
    #allocation4 [shape = 's32[1]{0}', space=sflag, size = 0x4, scoped, tag = 'scoped memory for tpu_custom_call.1']
    #allocation5 [shape = 'u8[512]{0}', space=vmem, size = 0x400, scoped, tag = 'output window, operand 0, single buffered']
    %6 = vsyncpa [#allocation3], 0
    %7 = vsyncpa [#allocation4], 0
    // Predicated region
    $region2: #{tpu_custom_call.1} parent=1 // pred_check
      _
    $region3: #{tpu_custom_call.1} parent=1 // pred_check_branch
      %9 = sbr.rel (0) target = $region5
    $region4: #{tpu_custom_call.1} parent=1 // pred_region
      %s10 = sadd.s32 0, 0
      %s12 = ssub.s32 128, 128
      %13 = vsyncadd [#allocation3], %s12
      %s14 = smul.addr %s10, 128
      %s15 = scalar_lea.hbm %s0, %s14
      %s17 = sshll.u32 [#allocation2], 4
      %s18 = int_to_ptr.vmem [resolvable:$true] %s17
      %20 = dma.hbm_to_vmem [thread:$0]  %s15, 128, %s18, [#allocation3]
    $region5: #{tpu_custom_call.1} parent=1 // pred_fallthru
      _
    // Predicated region
    $region6: #{tpu_custom_call.1} parent=1 // pred_check
      _
    $region7: #{tpu_custom_call.1} parent=1 // pred_check_branch
      %22 = sbr.rel (0) target = $region9
    $region8: #{tpu_custom_call.1} parent=1 // pred_region
      %23 = dma.done [#allocation3], 128
    $region9: #{tpu_custom_call.1} parent=1 // pred_fallthru
      _
    %s24 = sadd.s32 0, 0
    %p26 = scmp.eq.s32.totalorder 0, 0
    // Predicated region
    $region10: #{tpu_custom_call.1} parent=1 // pred_check
      %p27 = pneg %p26
    $region11: #{tpu_custom_call.1} parent=1 // pred_check_branch
      %29 = sbr.rel (%p27) target = $region13
    $region12: #{tpu_custom_call.1} parent=1 // pred_region
      %30 = vst [vmem:[#allocation5] sm:$0x1] 0.0
    $region13: #{tpu_custom_call.1} parent=1 // pred_fallthru
      _
    %v31 = vld [vmem:[#allocation2] sm:$0x1]
    %v32 = vcvt.f32.s32.to.zero.pseudo %v31
    %v33 = vld [vmem:[#allocation2 + $0x1] sm:$0x1]
    %v34 = vld [vmem:[#allocation2 + $0x2] sm:$0x1]
    %v35 = vld [vmem:[#allocation2 + $0x3] sm:$0x1]
    %v36 = vmul.f32 %v33, 1.8897259
    %v37 = vrcp.pop %v36
    %v38 = vmul.f32 %v34, %v37
    %v39 = vsub.f32 %v38, 1.0
    %v40 = vmul.f32 %v39, -16.0
    %v41 = vmul.f32 %v40, 1.442695
    %v42 = vpow.pop %v41
    %v43 = vadd.f32 %v42, 1.0
    %v44 = vrcp.pop %v43
    %v45 = vmul.f32 1.0, %v44
    %vm46 = vcmp.gt.f32.partialorder %v35, 0.0
    %v47 = vsel %vm46, %v45, 0.0
    %v48 = vld [vmem:[#allocation5] sm:$0x1]
    %v49 = vpack.c.bf16 %v47, %v47
    %v50 = vunpack.c.l.bf16 %v49
    %v51 = vsub.f32 %v47, %v50
    %v52 = vpack.c.bf16 %v51, %v51
    %v53 = vlaneseq
    %v54 = vshrl.u32 %v53, 7
    %v55 = vadd.s32 %v54, 8
    %v56 = vadd.s32 %v54, 16
    %v57 = vadd.s32 %v54, 24
    %v58 = vadd.s32 %v54, 32
    %v59 = vadd.s32 %v54, 40
    %v60 = vadd.s32 %v54, 48
    %v61 = vadd.s32 %v54, 56
    %v62 = vadd.s32 %v54, 64
    %v63 = vadd.s32 %v54, 72
    %v64 = vadd.s32 %v54, 80
    %v65 = vadd.s32 %v54, 88
    %v66 = vadd.s32 %v54, 96
    %v67 = vadd.s32 %v54, 104
    %v68 = vadd.s32 %v54, 112
    %v69 = vadd.s32 %v54, 120
    %v70 = vlaneseq
    %v71 = vshrl.u32 %v70, 7
    %v72 = vsub.s32 0, %v71
    %v73 = vrot.slane %v32, %v72
    %vm74 = vcmp.eq.s32.totalorder %v54, %v73
    %vm75 = vcmp.eq.s32.totalorder %v55, %v73
    %vm76 = vcmp.eq.s32.totalorder %v56, %v73
    %vm77 = vcmp.eq.s32.totalorder %v57, %v73
    %vm78 = vcmp.eq.s32.totalorder %v58, %v73
    %vm79 = vcmp.eq.s32.totalorder %v59, %v73
    %vm80 = vcmp.eq.s32.totalorder %v60, %v73
    %vm81 = vcmp.eq.s32.totalorder %v61, %v73
    %vm82 = vcmp.eq.s32.totalorder %v62, %v73
    %vm83 = vcmp.eq.s32.totalorder %v63, %v73
    %vm84 = vcmp.eq.s32.totalorder %v64, %v73
    %vm85 = vcmp.eq.s32.totalorder %v65, %v73
    %vm86 = vcmp.eq.s32.totalorder %v66, %v73
    %vm87 = vcmp.eq.s32.totalorder %v67, %v73
    %vm88 = vcmp.eq.s32.totalorder %v68, %v73
    %vm89 = vcmp.eq.s32.totalorder %v69, %v73
    %v90 = vsel %vm74, 1, 0
    %v91 = vsel %vm75, 1, 0
    %v92 = vsel %vm76, 1, 0
    %v93 = vsel %vm77, 1, 0
    %v94 = vsel %vm78, 1, 0
    %v95 = vsel %vm79, 1, 0
    %v96 = vsel %vm80, 1, 0
    %v97 = vsel %vm81, 1, 0
    %v98 = vsel %vm82, 1, 0
    %v99 = vsel %vm83, 1, 0
    %v100 = vsel %vm84, 1, 0
    %v101 = vsel %vm85, 1, 0
    %v102 = vsel %vm86, 1, 0
    %v103 = vsel %vm87, 1, 0
    %v104 = vsel %vm88, 1, 0
    %v105 = vsel %vm89, 1, 0
    %v106 = vcvt.s32.f32 %v90
    %v107 = vcvt.s32.f32 %v91
    %v108 = vcvt.s32.f32 %v92
    %v109 = vcvt.s32.f32 %v93
    %v110 = vcvt.s32.f32 %v94
    %v111 = vcvt.s32.f32 %v95
    %v112 = vcvt.s32.f32 %v96
    %v113 = vcvt.s32.f32 %v97
    %v114 = vcvt.s32.f32 %v98
    %v115 = vcvt.s32.f32 %v99
    %v116 = vcvt.s32.f32 %v100
    %v117 = vcvt.s32.f32 %v101
    %v118 = vcvt.s32.f32 %v102
    %v119 = vcvt.s32.f32 %v103
    %v120 = vcvt.s32.f32 %v104
    %v121 = vcvt.s32.f32 %v105
    %v122 = vpack.c.bf16 %v107, %v106
    %v123 = vpack.c.bf16 %v109, %v108
    %v124 = vpack.c.bf16 %v111, %v110
    %v125 = vpack.c.bf16 %v113, %v112
    %v126 = vpack.c.bf16 %v115, %v114
    %v127 = vpack.c.bf16 %v117, %v116
    %v128 = vpack.c.bf16 %v119, %v118
    %v129 = vpack.c.bf16 %v121, %v120
    %130 = vmatprep.subr.bf16.mxu0 0
    %131 = vmatpush1.bf16.xpose.msra.mxu0 %v122
    %132 = vmatprep.subr.bf16.mxu0 0
    %133 = vmatpush1.bf16.xpose.msra.mxu0 %v123
    %134 = vmatprep.subr.bf16.mxu0 0
    %135 = vmatpush1.bf16.xpose.msra.mxu0 %v124
    %136 = vmatprep.subr.bf16.mxu0 0
    %137 = vmatpush1.bf16.xpose.msra.mxu0 %v125
    %138 = vmatprep.subr.bf16.mxu0 0
    %139 = vmatpush1.bf16.xpose.msra.mxu0 %v126
    %140 = vmatprep.subr.bf16.mxu0 0
    %141 = vmatpush1.bf16.xpose.msra.mxu0 %v127
    %142 = vmatprep.subr.bf16.mxu0 0
    %143 = vmatpush1.bf16.xpose.msra.mxu0 %v128
    %144 = vmatprep.subr.bf16.mxu0 0
    %145 = vmatpush1.bf16.xpose.msra.mxu0 %v129
    %146 = vmatprep.subr.bf16.mxu0 0
    %147 = vmatpush1.bf16.xpose.msra.mxu0 0
    %148 = vmatprep.subr.bf16.mxu0 0
    %149 = vmatpush1.bf16.xpose.msra.mxu0 0
    %150 = vmatprep.subr.bf16.mxu0 0
    %151 = vmatpush1.bf16.xpose.msra.mxu0 0
    %152 = vmatprep.subr.bf16.mxu0 0
    %153 = vmatpush1.bf16.xpose.msra.mxu0 0
    %154 = vmatprep.subr.bf16.mxu0 0
    %155 = vmatpush1.bf16.xpose.msra.mxu0 0
    %156 = vmatprep.subr.bf16.mxu0 0
    %157 = vmatpush1.bf16.xpose.msra.mxu0 0
    %158 = vmatprep.subr.bf16.mxu0 0
    %159 = vmatpush1.bf16.xpose.msra.mxu0 0
    %160 = vmatprep.subr.bf16.mxu0 0
    %161 = vmatpush1.bf16.xpose.msra.mxu0 0
    %162 = vmatprep.mubr.bf16.mxu0 0
    %163 = vmatmul.mubr.bf16.gmra.mrb[0].mxu0 %v52
    %v164 = vpop.f32.mrb[0].mxu0
    %v165 = vadd.f32 0.0, %v164
    %v166 = vpop.f32.mrb[0].mxu0
    %v167 = vpop.f32.mrb[0].mxu0
    %v168 = vpop.f32.mrb[0].mxu0
    %169 = vdwg.mxu0
    %170 = vmatprep.subr.bf16.mxu0 0
    %171 = vmatpush1.bf16.xpose.msra.mxu0 %v122
    %172 = vmatprep.subr.bf16.mxu0 0
    %173 = vmatpush1.bf16.xpose.msra.mxu0 %v123
    %174 = vmatprep.subr.bf16.mxu0 0
    %175 = vmatpush1.bf16.xpose.msra.mxu0 %v124
    %176 = vmatprep.subr.bf16.mxu0 0
    %177 = vmatpush1.bf16.xpose.msra.mxu0 %v125
    %178 = vmatprep.subr.bf16.mxu0 0
    %179 = vmatpush1.bf16.xpose.msra.mxu0 %v126
    %180 = vmatprep.subr.bf16.mxu0 0
    %181 = vmatpush1.bf16.xpose.msra.mxu0 %v127
    %182 = vmatprep.subr.bf16.mxu0 0
    %183 = vmatpush1.bf16.xpose.msra.mxu0 %v128
    %184 = vmatprep.subr.bf16.mxu0 0
    %185 = vmatpush1.bf16.xpose.msra.mxu0 %v129
    %186 = vmatprep.subr.bf16.mxu0 0
    %187 = vmatpush1.bf16.xpose.msra.mxu0 0
    %188 = vmatprep.subr.bf16.mxu0 0
    %189 = vmatpush1.bf16.xpose.msra.mxu0 0
    %190 = vmatprep.subr.bf16.mxu0 0
    %191 = vmatpush1.bf16.xpose.msra.mxu0 0
    %192 = vmatprep.subr.bf16.mxu0 0
    %193 = vmatpush1.bf16.xpose.msra.mxu0 0
    %194 = vmatprep.subr.bf16.mxu0 0
    %195 = vmatpush1.bf16.xpose.msra.mxu0 0
    %196 = vmatprep.subr.bf16.mxu0 0
    %197 = vmatpush1.bf16.xpose.msra.mxu0 0
    %198 = vmatprep.subr.bf16.mxu0 0
    %199 = vmatpush1.bf16.xpose.msra.mxu0 0
    %200 = vmatprep.subr.bf16.mxu0 0
    %201 = vmatpush1.bf16.xpose.msra.mxu0 0
    %202 = vmatprep.mubr.bf16.mxu0 0
    %203 = vmatmul.mubr.bf16.gmra.mrb[0].mxu0 %v49
    %v204 = vpop.f32.mrb[0].mxu0
    %v205 = vadd.f32 %v165, %v204
    %v206 = vpop.f32.mrb[0].mxu0
    %v207 = vpop.f32.mrb[0].mxu0
    %v208 = vpop.f32.mrb[0].mxu0
    %209 = vdwg.mxu0
    %v210 = vadd.f32 %v48, %v205
    %211 = vst [vmem:[#allocation5] sm:$0x1] %v210
    // Predicated region
    $region14: #{tpu_custom_call.1} parent=1 // pred_check
      _
    $region15: #{tpu_custom_call.1} parent=1 // pred_check_branch
      %213 = sbr.rel (0) target = $region17
    $region16: #{tpu_custom_call.1} parent=1 // pred_region
      %s215 = ssub.s32 16, 16
      %216 = vsyncadd [#allocation4], %s215
      %s218 = sshll.u32 [#allocation5], 4
      %s219 = int_to_ptr.vmem [resolvable:$true] %s218
      %221 = dma.vmem_to_hbm [thread:$0]  %s219, 16, %s1, [#allocation4]
    $region17: #{tpu_custom_call.1} parent=1 // pred_fallthru
      _
    // Predicated region
    $region18: #{tpu_custom_call.1} parent=1 // pred_check
      _
    $region19: #{tpu_custom_call.1} parent=1 // pred_check_branch
      %223 = sbr.rel (0) target = $region21
    $region20: #{tpu_custom_call.1} parent=1 // pred_region
      %224 = dma.done [#allocation4], 16
    $region21: #{tpu_custom_call.1} parent=1 // pred_fallthru
      _
    %225 = vsyncpa [#allocation3], 1
    %226 = vsyncpa [#allocation4], 1

</llo_original>
